<compile_context>
chip_gen: v6e
topology: v6e:2x2x1
jax: 0.10.0
libtpu: 0.0.40
codegen_flags: <defaults>
</compile_context>

<pallas_src>
import functools

import numpy as np
import jax
import jax.numpy as jnp
from jax.experimental import pallas as pl
from jax.experimental.pallas import tpu as pltpu


# ----------------------------------------------------------------------------
# Kernel
# ----------------------------------------------------------------------------
def _biasfree_ln_kernel(x_ref, w_ref, o_ref, *, eps):
    x = x_ref[...].astype(jnp.float32)            # (TM, C)
    w = w_ref[...].astype(jnp.float32)            # (1, C) -- constant block, DMA'd once

    # unbiased=False variance along the channel (lane) axis
    mu = jnp.mean(x, axis=-1, keepdims=True)
    xc = x - mu
    var = jnp.mean(xc * xc, axis=-1, keepdims=True)

    inv = jax.lax.rsqrt(var + eps)                # EUP rsqrt -> no VPU divide
    # bias-free: scale x itself (mean is NOT subtracted in the output)
    o_ref[...] = (x * inv * w).astype(o_ref.dtype)


def _pick_row_tile(m: int) -> int:
    """Largest power-of-two row tile that divides M and leaves >= 2 grid steps."""
    for tm in (1024, 512, 256, 128, 64, 32, 16, 8):
        if m % tm == 0 and m // tm >= 2:
            return tm
    return m  # single full block (still valid: block == full array dims)


# ----------------------------------------------------------------------------
# Wrapper
# ----------------------------------------------------------------------------
def biasfree_layernorm(x, weight, *, eps=1e-5):
    """x: (..., C), weight: (C,) -> same shape/dtype as x."""
    orig_shape = x.shape
    C = orig_shape[-1]
    M = int(np.prod(orig_shape[:-1]))

    x2 = x.reshape(M, C)
    w2 = weight.reshape(1, C)

    TM = _pick_row_tile(M)
    grid = (M // TM,)

    kernel = functools.partial(_biasfree_ln_kernel, eps=eps)
    out = pl.pallas_call(
        kernel,
        out_shape=jax.ShapeDtypeStruct((M, C), x.dtype),
        grid=grid,
        in_specs=[
            pl.BlockSpec((TM, C), lambda i: (i, 0)),   # row tile, C whole on lanes
            pl.BlockSpec((1, C), lambda i: (0, 0)),    # weight: constant block index
        ],
        out_specs=pl.BlockSpec((TM, C), lambda i: (i, 0)),
        compiler_params=pltpu.CompilerParams(
            dimension_semantics=("parallel",),         # rows independent -> megacore on v7x
        ),
    )(x2, w2)
    return out.reshape(orig_shape)


# ----------------------------------------------------------------------------
# Pure-JAX reference (same math as the torch module)
# ----------------------------------------------------------------------------
def biasfree_layernorm_ref(x, weight, *, eps=1e-5):
    var = jnp.var(x, axis=-1, keepdims=True)           # ddof=0 == unbiased=False
    return x / jnp.sqrt(var + eps) * weight


# ----------------------------------------------------------------------------
# Main
# ----------------------------------------------------------------------------
if __name__ == "__main__":
    # MiJUN-style usage: (B, C, H, W) feature map normalized over channels
    # after a to_3d rearrange -> x of shape (B, H*W, C).
    B, C, H, W = 2, 48, 16, 16
    eps = 1e-5

    key = jax.random.PRNGKey(0)
    kx, kw = jax.random.split(key, 2)

    x = jax.random.normal(kx, (B, H * W, C), jnp.float32)
    # module initializes weight to ones; perturb so the scale is actually tested
    weight = 1.0 + 0.02 * jax.random.normal(kw, (C,), jnp.float32)

    out = biasfree_layernorm(x, weight, eps=eps)
    out = jax.block_until_ready(out)

    ref = biasfree_layernorm_ref(x, weight, eps=eps)
    np.testing.assert_allclose(np.asarray(out), np.asarray(ref), rtol=1e-3, atol=1e-3)
    assert out.shape == x.shape and out.dtype == x.dtype

    print("KERNEL_OK")
</pallas_src>

<mosaic_0001>
module attributes {stable_mosaic.version = 11 : i64} {
  func.func @_biasfree_ln_kernel(%arg0: i32, %arg1: memref<256x48xf32, #tpu.memory_space<vmem>>, %arg2: memref<1x48xf32, #tpu.memory_space<vmem>>, %arg3: memref<256x48xf32, #tpu.memory_space<vmem>>) attributes {dimension_semantics = [#tpu.dimension_semantics<parallel>], iteration_bounds = array<i64: 2>, scalar_prefetch = 0 : i64, scratch_operands = 0 : i64, tpu.core_type = #tpu.core_type<tc>, window_params = [{transform_indices = @transform_0, window_bounds = array<i64: 256, 48>}, {pipeline_mode = #tpu.pipeline_mode<synchronous>, transform_indices = @transform_1, window_bounds = array<i64: 1, 48>}, {transform_indices = @transform_2, window_bounds = array<i64: 256, 48>}]} {
    %c0 = arith.constant 0 : index
    %c0_0 = arith.constant 0 : index
    %0 = vector.load %arg1[%c0, %c0_0] : memref<256x48xf32, #tpu.memory_space<vmem>>, vector<256x48xf32>
    %c0_1 = arith.constant 0 : index
    %c0_2 = arith.constant 0 : index
    %1 = vector.load %arg2[%c0_1, %c0_2] : memref<1x48xf32, #tpu.memory_space<vmem>>, vector<1x48xf32>
    %cst = arith.constant dense<0.000000e+00> : vector<256xf32>
    %2 = vector.multi_reduction <add>, %0, %cst [1] : vector<256x48xf32> to vector<256xf32>
    %3 = vector.shape_cast %2 : vector<256xf32> to vector<256x1xf32>
    %cst_3 = arith.constant 4.800000e+01 : f32
    %4 = vector.broadcast %cst_3 : f32 to vector<256x1xf32>
    %5 = arith.divf %3, %4 : vector<256x1xf32>
    %6 = vector.broadcast %5 : vector<256x1xf32> to vector<256x48xf32>
    %7 = arith.subf %0, %6 : vector<256x48xf32>
    %8 = arith.mulf %7, %7 : vector<256x48xf32>
    %cst_4 = arith.constant dense<0.000000e+00> : vector<256xf32>
    %9 = vector.multi_reduction <add>, %8, %cst_4 [1] : vector<256x48xf32> to vector<256xf32>
    %10 = vector.shape_cast %9 : vector<256xf32> to vector<256x1xf32>
    %cst_5 = arith.constant 4.800000e+01 : f32
    %11 = vector.broadcast %cst_5 : f32 to vector<256x1xf32>
    %12 = arith.divf %10, %11 : vector<256x1xf32>
    %cst_6 = arith.constant 9.99999974E-6 : f32
    %13 = vector.broadcast %cst_6 : f32 to vector<256x1xf32>
    %14 = arith.addf %12, %13 : vector<256x1xf32>
    %15 = math.rsqrt %14 : vector<256x1xf32>
    %16 = vector.broadcast %15 : vector<256x1xf32> to vector<256x48xf32>
    %17 = arith.mulf %0, %16 : vector<256x48xf32>
    %18 = vector.broadcast %1 : vector<1x48xf32> to vector<256x48xf32>
    %19 = arith.mulf %17, %18 : vector<256x48xf32>
    %c0_7 = arith.constant 0 : index
    %c0_8 = arith.constant 0 : index
    %20 = vector.load %arg3[%c0_7, %c0_8] : memref<256x48xf32, #tpu.memory_space<vmem>>, vector<256x48xf32>
    tpu.vector_store %arg3[%c0_7, %c0_8], %19 {strides = array<i32>} : memref<256x48xf32, #tpu.memory_space<vmem>>, vector<256x48xf32>,
    return
  }
  func.func @transform_0(%arg0: i32) -> (i32, i32) {
    %c0_i32 = arith.constant 0 : i32
    %c0_i32_0 = arith.constant 0 : i32
    return %arg0, %c0_i32 : i32, i32
  }
  func.func @transform_1(%arg0: i32) -> (i32, i32) {
    %c0_i32 = arith.constant 0 : i32
    %c0_i32_0 = arith.constant 0 : i32
    %c0_i32_1 = arith.constant 0 : i32
    return %c0_i32, %c0_i32_0 : i32, i32
  }
  func.func @transform_2(%arg0: i32) -> (i32, i32) {
    %c0_i32 = arith.constant 0 : i32
    %c0_i32_0 = arith.constant 0 : i32
    return %arg0, %c0_i32 : i32, i32
  }
}

</mosaic_0001>

<llo_original>
// kernel: tpu_custom_call.1
$region0: #{tpu_custom_call.1}
  #allocation0 [shape = 'u32[]', space=smem, size = 0x4, offset = 0x4, fixed_abs, tag = 'smem constant byte address 0x4 - core index']
  #allocation1 [shape = 'u32[144,128]{1,0:T(1,128)}', space=vmem, size = 0x12000, scoped, tag = 'internal scratch']
  %s0 = inlined_call_operand.vmem [shape: f32[512,48], index: 0, kind: input, shape index: {}]
  %s1 = inlined_call_operand.vmem [shape: f32[1,48], index: 1, kind: input, shape index: {}]
  %s2 = inlined_call_operand.vmem [shape: f32[512,48], index: 2, kind: output, shape index: {}]
  %s3 = sld [smem:[#allocation0]]
  $region41: #{tpu_custom_call.1} parent=0
    _
  %s5 = ssub.s32 1, %s3
  %s6 = scalar_select 0, %s5, %s3
  loop: start=0, step=1, limit=4
  $region2: #{tpu_custom_call.1} parent=0 // loop_pre_header
    _
  $region3: #{tpu_custom_call.1} parent=0 // loop_header
    %s8 = sphi 0, %s12
    %p9 = scmp.ge.s32.totalorder %s8, 4
    %s18 = sphi 0, %s20
    %s21 = sphi 0, %s18
    %s22 = sphi 0, %s21
    %s38 = sphi 0, %s22
    %s42 = sphi 0, %s42
    %s44 = sphi 0, %s42
    %s45 = sphi 0, %s44
    %s59 = sphi 0, %s45
    %s65 = sphi 0, %s67
    %s68 = sphi 0, %s65
    %s69 = sphi 0, %s68
    %s85 = sphi 0, %s69
  $region4: #{tpu_custom_call.1} parent=0 // loop_header_branch
    %11 = sbr.rel (%p9) target = $region8
  $region5: #{tpu_custom_call.1} parent=0 // loop_body
    %s13 = ssub.s32 %s8, 1
    %s14 = ssub.s32 %s8, 2
    %s15 = sadd.s32 %s8, 1
    %s16 = ssub.s32 %s8, %s15
    %p17 = scmp.eq.s32.totalorder %s16, 0
    %s19 = sadd.s32 %s18, 1
    %s20 = scalar_select %p17, %s18, %s19
    %p23 = pneg %p17
    %p24 = scmp.eq.s32.totalorder %s8, 1
    %p25 = por %p23, %p24
    %p26 = scmp.ne.s32.totalorder %s18, %s21
    %p27 = scmp.eq.s32.totalorder %s8, 0
    %p28 = por %p26, %p27
    %p29 = scmp.ne.s32.totalorder %s18, %s21
    %p30 = scmp.eq.s32.totalorder %s13, 1
    %p31 = por %p29, %p30
    %p32 = scmp.ne.s32.totalorder %s21, %s22
    %p33 = scmp.eq.s32.totalorder %s13, 0
    %p34 = por %p32, %p33
    %p35 = scmp.ne.s32.totalorder %s21, %s22
    %p36 = scmp.eq.s32.totalorder %s14, 1
    %p37 = por %p35, %p36
    %p39 = scmp.ne.s32.totalorder %s22, %s38
    %p40 = scmp.eq.s32.totalorder %s14, 0
    %p41 = por %p39, %p40
    %s43 = sadd.s32 %s42, 1
    %p46 = scmp.eq.s32.totalorder %s8, 1
    %p47 = scmp.ne.s32.totalorder %s42, %s44
    %p48 = scmp.eq.s32.totalorder %s8, 0
    %p49 = por %p47, %p48
    %p50 = scmp.ne.s32.totalorder %s42, %s44
    %p51 = scmp.eq.s32.totalorder %s13, 1
    %p52 = por %p50, %p51
    %p53 = scmp.ne.s32.totalorder %s44, %s45
    %p54 = scmp.eq.s32.totalorder %s13, 0
    %p55 = por %p53, %p54
    %p56 = scmp.ne.s32.totalorder %s44, %s45
    %p57 = scmp.eq.s32.totalorder %s14, 1
    %p58 = por %p56, %p57
    %p60 = scmp.ne.s32.totalorder %s45, %s59
    %p61 = scmp.eq.s32.totalorder %s14, 0
    %p62 = por %p60, %p61
    %s63 = ssub.s32 %s8, %s15
    %p64 = scmp.eq.s32.totalorder %s63, 0
    %s66 = sadd.s32 %s65, 1
    %s67 = scalar_select %p64, %s65, %s66
    %p70 = pneg %p64
    %p71 = scmp.eq.s32.totalorder %s8, 1
    %p72 = por %p70, %p71
    %p73 = scmp.ne.s32.totalorder %s65, %s68
    %p74 = scmp.eq.s32.totalorder %s8, 0
    %p75 = por %p73, %p74
    %p76 = scmp.ne.s32.totalorder %s65, %s68
    %p77 = scmp.eq.s32.totalorder %s13, 1
    %p78 = por %p76, %p77
    %p79 = scmp.ne.s32.totalorder %s68, %s69
    %p80 = scmp.eq.s32.totalorder %s13, 0
    %p81 = por %p79, %p80
    %p82 = scmp.ne.s32.totalorder %s68, %s69
    %p83 = scmp.eq.s32.totalorder %s14, 1
    %p84 = por %p82, %p83
    %p86 = scmp.ne.s32.totalorder %s69, %s85
    %p87 = scmp.eq.s32.totalorder %s14, 0
    %p88 = por %p86, %p87
    %p89 = scmp.le.s32.totalorder 1, %s8
    %p90 = scmp.lt.s32.totalorder %s8, 3
    %p91 = pnand %p89, %p90
    %p92 = pneg %p91
    // Predicated region
    $region9: #{tpu_custom_call.1} parent=5 // pred_check
      _
    $region10: #{tpu_custom_call.1} parent=5 // pred_check_branch
      %94 = sbr.rel (%p91) target = $region12
    $region11: #{tpu_custom_call.1} parent=5 // pred_region
      %s95 = ssub.s32 %s8, 1
      // Predicated region
      $region13: #{tpu_custom_call.1} parent=11 // pred_check
        %p96 = pneg %p55
      $region14: #{tpu_custom_call.1} parent=11 // pred_check_branch
        %98 = sbr.rel (%p96) target = $region16
      $region15: #{tpu_custom_call.1} parent=11 // pred_region
        _
      $region16: #{tpu_custom_call.1} parent=11 // pred_fallthru
        _
    $region12: #{tpu_custom_call.1} parent=5 // pred_fallthru
      _
    %p99 = scmp.lt.s32.totalorder %s8, 2
    // Predicated region
    $region17: #{tpu_custom_call.1} parent=5 // pred_check
      %p100 = pneg %p99
    $region18: #{tpu_custom_call.1} parent=5 // pred_check_branch
      %102 = sbr.rel (%p100) target = $region20
    $region19: #{tpu_custom_call.1} parent=5 // pred_region
      // Predicated region
      $region21: #{tpu_custom_call.1} parent=19 // pred_check
        %p103 = pneg %p28
      $region22: #{tpu_custom_call.1} parent=19 // pred_check_branch
        %105 = sbr.rel (%p103) target = $region24
      $region23: #{tpu_custom_call.1} parent=19 // pred_region
        %s106 = smul.u32 32, %s8
        %p107 = scmp.lt.s32.totalorder %s106, 63
        %s108 = scalar_select %p107, %s106, 63
        %s109 = smul.addr %s108, 8
        %s110 = scalar_lea.vmem %s0, %s109
        %s111 = smul.u32 32, %s8
      $region24: #{tpu_custom_call.1} parent=19 // pred_fallthru
        _
    $region20: #{tpu_custom_call.1} parent=5 // pred_fallthru
      _
    %p112 = scmp.le.s32.totalorder 1, %s8
    %p113 = scmp.lt.s32.totalorder %s8, 3
    %p114 = pnand %p112, %p113
    %p115 = pneg %p114
    // Predicated region
    $region25: #{tpu_custom_call.1} parent=5 // pred_check
      _
    $region26: #{tpu_custom_call.1} parent=5 // pred_check_branch
      %117 = sbr.rel (%p114) target = $region28
    $region27: #{tpu_custom_call.1} parent=5 // pred_region
      %s118 = ssub.s32 %s8, 1
      %s119 = smul.u32 32, %s13
      %p120 = scmp.lt.s32.totalorder %s119, 63
      %s121 = scalar_select %p120, %s119, 63
      %s122 = smul.addr %s121, 8
      %s123 = scalar_lea.vmem %s0, %s122
      %p124 = pneg %p34
      %p125 = pneg %p31
      %p126 = pneg %p55
      %p127 = pneg %p52
      %p128 = pneg %p81
      %p129 = pneg %p78
      %s130 = smul.u32 32, %s13
      %p131 = scmp.lt.s32.totalorder %s130, 63
      %s132 = scalar_select %p131, %s130, 63
      %s133 = smul.addr %s132, 8
      %s134 = scalar_lea.vmem %s2, %s133
      %s135 = smul.u32 32, %s13
      %p136 = scmp.lt.s32.totalorder %s135, 63
      %s137 = scalar_select %p136, %s135, 63
      %s138 = smul.addr %s137, 8
      %s139 = scalar_lea.vmem %s0, %s138
      %s140 = smul.u32 32, %s13
      %s141 = smul.u32 32, %s13
      %p142 = scmp.lt.s32.totalorder %s141, 63
      %s143 = scalar_select %p142, %s141, 63
      %s144 = smul.addr %s143, 8
      %s145 = scalar_lea.vmem %s2, %s144
      %s146 = smul.u32 32, %s13
      %v147 = vld [vmem:[%s139] sm:$0xff]
      %v148 = vld [vmem:[%s139 + $0x8] sm:$0xff]
      %v149 = vld [vmem:[%s139 + $0x10] sm:$0xff]
      %v150 = vld [vmem:[%s139 + $0x18] sm:$0xff]
      %v151 = vld [vmem:[%s139 + $0x20] sm:$0xff]
      %v152 = vld [vmem:[%s139 + $0x28] sm:$0xff]
      %v153 = vld [vmem:[%s139 + $0x30] sm:$0xff]
      %v154 = vld [vmem:[%s139 + $0x38] sm:$0xff]
      %v155 = vld [vmem:[%s139 + $0x40] sm:$0xff]
      %v156 = vld [vmem:[%s139 + $0x48] sm:$0xff]
      %v157 = vld [vmem:[%s139 + $0x50] sm:$0xff]
      %v158 = vld [vmem:[%s139 + $0x58] sm:$0xff]
      %v159 = vld [vmem:[%s139 + $0x60] sm:$0xff]
      %v160 = vld [vmem:[%s139 + $0x68] sm:$0xff]
      %v161 = vld [vmem:[%s139 + $0x70] sm:$0xff]
      %v162 = vld [vmem:[%s139 + $0x78] sm:$0xff]
      %v163 = vld [vmem:[%s139 + $0x80] sm:$0xff]
      %v164 = vld [vmem:[%s139 + $0x88] sm:$0xff]
      %v165 = vld [vmem:[%s139 + $0x90] sm:$0xff]
      %v166 = vld [vmem:[%s139 + $0x98] sm:$0xff]
      %v167 = vld [vmem:[%s139 + $0xa0] sm:$0xff]
      %v168 = vld [vmem:[%s139 + $0xa8] sm:$0xff]
      %v169 = vld [vmem:[%s139 + $0xb0] sm:$0xff]
      %v170 = vld [vmem:[%s139 + $0xb8] sm:$0xff]
      %v171 = vld [vmem:[%s139 + $0xc0] sm:$0xff]
      %v172 = vld [vmem:[%s139 + $0xc8] sm:$0xff]
      %v173 = vld [vmem:[%s139 + $0xd0] sm:$0xff]
      %v174 = vld [vmem:[%s139 + $0xd8] sm:$0xff]
      %v175 = vld [vmem:[%s139 + $0xe0] sm:$0xff]
      %v176 = vld [vmem:[%s139 + $0xe8] sm:$0xff]
      %v177 = vld [vmem:[%s139 + $0xf0] sm:$0xff]
      %v178 = vld [vmem:[%s139 + $0xf8] sm:$0xff]
      %v179 = vld [vmem:[%s1] sm:$0x1]
      %vm180 = vcmask 392192
      %v181 = vsel %vm180, %v147, 0.0
      %182 = vadd.xlane.f32.xlu0 %v181
      %v183 = vpop.xlane.xlu0 %182
      %v184 = vsel %vm180, %v148, 0.0
      %185 = vadd.xlane.f32.xlu0 %v184
      %v186 = vpop.xlane.xlu0 %185
      %v187 = vsel %vm180, %v149, 0.0
      %188 = vadd.xlane.f32.xlu0 %v187
      %v189 = vpop.xlane.xlu0 %188
      %v190 = vsel %vm180, %v150, 0.0
      %191 = vadd.xlane.f32.xlu0 %v190
      %v192 = vpop.xlane.xlu0 %191
      %v193 = vsel %vm180, %v151, 0.0
      %194 = vadd.xlane.f32.xlu0 %v193
      %v195 = vpop.xlane.xlu0 %194
      %v196 = vsel %vm180, %v152, 0.0
      %197 = vadd.xlane.f32.xlu0 %v196
      %v198 = vpop.xlane.xlu0 %197
      %v199 = vsel %vm180, %v153, 0.0
      %200 = vadd.xlane.f32.xlu0 %v199
      %v201 = vpop.xlane.xlu0 %200
      %v202 = vsel %vm180, %v154, 0.0
      %203 = vadd.xlane.f32.xlu0 %v202
      %v204 = vpop.xlane.xlu0 %203
      %v205 = vsel %vm180, %v155, 0.0
      %206 = vadd.xlane.f32.xlu0 %v205
      %v207 = vpop.xlane.xlu0 %206
      %v208 = vsel %vm180, %v156, 0.0
      %209 = vadd.xlane.f32.xlu0 %v208
      %v210 = vpop.xlane.xlu0 %209
      %v211 = vsel %vm180, %v157, 0.0
      %212 = vadd.xlane.f32.xlu0 %v211
      %v213 = vpop.xlane.xlu0 %212
      %v214 = vsel %vm180, %v158, 0.0
      %215 = vadd.xlane.f32.xlu0 %v214
      %v216 = vpop.xlane.xlu0 %215
      %v217 = vsel %vm180, %v159, 0.0
      %218 = vadd.xlane.f32.xlu0 %v217
      %v219 = vpop.xlane.xlu0 %218
      %v220 = vsel %vm180, %v160, 0.0
      %221 = vadd.xlane.f32.xlu0 %v220
      %v222 = vpop.xlane.xlu0 %221
      %v223 = vsel %vm180, %v161, 0.0
      %224 = vadd.xlane.f32.xlu0 %v223
      %v225 = vpop.xlane.xlu0 %224
      %v226 = vsel %vm180, %v162, 0.0
      %227 = vadd.xlane.f32.xlu0 %v226
      %v228 = vpop.xlane.xlu0 %227
      %v229 = vsel %vm180, %v163, 0.0
      %230 = vadd.xlane.f32.xlu0 %v229
      %v231 = vpop.xlane.xlu0 %230
      %v232 = vsel %vm180, %v164, 0.0
      %233 = vadd.xlane.f32.xlu0 %v232
      %v234 = vpop.xlane.xlu0 %233
      %v235 = vsel %vm180, %v165, 0.0
      %236 = vadd.xlane.f32.xlu0 %v235
      %v237 = vpop.xlane.xlu0 %236
      %v238 = vsel %vm180, %v166, 0.0
      %239 = vadd.xlane.f32.xlu0 %v238
      %v240 = vpop.xlane.xlu0 %239
      %v241 = vsel %vm180, %v167, 0.0
      %242 = vadd.xlane.f32.xlu0 %v241
      %v243 = vpop.xlane.xlu0 %242
      %v244 = vsel %vm180, %v168, 0.0
      %245 = vadd.xlane.f32.xlu0 %v244
      %v246 = vpop.xlane.xlu0 %245
      %v247 = vsel %vm180, %v169, 0.0
      %248 = vadd.xlane.f32.xlu0 %v247
      %v249 = vpop.xlane.xlu0 %248
      %v250 = vsel %vm180, %v170, 0.0
      %251 = vadd.xlane.f32.xlu0 %v250
      %v252 = vpop.xlane.xlu0 %251
      %v253 = vsel %vm180, %v171, 0.0
      %254 = vadd.xlane.f32.xlu0 %v253
      %v255 = vpop.xlane.xlu0 %254
      %v256 = vsel %vm180, %v172, 0.0
      %257 = vadd.xlane.f32.xlu0 %v256
      %v258 = vpop.xlane.xlu0 %257
      %v259 = vsel %vm180, %v173, 0.0
      %260 = vadd.xlane.f32.xlu0 %v259
      %v261 = vpop.xlane.xlu0 %260
      %v262 = vsel %vm180, %v174, 0.0
      %263 = vadd.xlane.f32.xlu0 %v262
      %v264 = vpop.xlane.xlu0 %263
      %v265 = vsel %vm180, %v175, 0.0
      %266 = vadd.xlane.f32.xlu0 %v265
      %v267 = vpop.xlane.xlu0 %266
      %v268 = vsel %vm180, %v176, 0.0
      %269 = vadd.xlane.f32.xlu0 %v268
      %v270 = vpop.xlane.xlu0 %269
      %v271 = vsel %vm180, %v177, 0.0
      %272 = vadd.xlane.f32.xlu0 %v271
      %v273 = vpop.xlane.xlu0 %272
      %v274 = vsel %vm180, %v178, 0.0
      %275 = vadd.xlane.f32.xlu0 %v274
      %v276 = vpop.xlane.xlu0 %275
      %v277 = vrcp.pop 48.0
      %v278 = vmul.f32 %v183, %v277
      %v279 = vmul.f32 %v186, %v277
      %v280 = vmul.f32 %v189, %v277
      %v281 = vmul.f32 %v192, %v277
      %v282 = vmul.f32 %v195, %v277
      %v283 = vmul.f32 %v198, %v277
      %v284 = vmul.f32 %v201, %v277
      %v285 = vmul.f32 %v204, %v277
      %v286 = vmul.f32 %v207, %v277
      %v287 = vmul.f32 %v210, %v277
      %v288 = vmul.f32 %v213, %v277
      %v289 = vmul.f32 %v216, %v277
      %v290 = vmul.f32 %v219, %v277
      %v291 = vmul.f32 %v222, %v277
      %v292 = vmul.f32 %v225, %v277
      %v293 = vmul.f32 %v228, %v277
      %v294 = vmul.f32 %v231, %v277
      %v295 = vmul.f32 %v234, %v277
      %v296 = vmul.f32 %v237, %v277
      %v297 = vmul.f32 %v240, %v277
      %v298 = vmul.f32 %v243, %v277
      %v299 = vmul.f32 %v246, %v277
      %v300 = vmul.f32 %v249, %v277
      %v301 = vmul.f32 %v252, %v277
      %v302 = vmul.f32 %v255, %v277
      %v303 = vmul.f32 %v258, %v277
      %v304 = vmul.f32 %v261, %v277
      %v305 = vmul.f32 %v264, %v277
      %v306 = vmul.f32 %v267, %v277
      %v307 = vmul.f32 %v270, %v277
      %v308 = vmul.f32 %v273, %v277
      %v309 = vmul.f32 %v276, %v277
      %v310 = vsub.f32 %v147, %v278
      %v311 = vsub.f32 %v148, %v279
      %v312 = vsub.f32 %v149, %v280
      %v313 = vsub.f32 %v150, %v281
      %v314 = vsub.f32 %v151, %v282
      %v315 = vsub.f32 %v152, %v283
      %v316 = vsub.f32 %v153, %v284
      %v317 = vsub.f32 %v154, %v285
      %v318 = vsub.f32 %v155, %v286
      %v319 = vsub.f32 %v156, %v287
      %v320 = vsub.f32 %v157, %v288
      %v321 = vsub.f32 %v158, %v289
      %v322 = vsub.f32 %v159, %v290
      %v323 = vsub.f32 %v160, %v291
      %v324 = vsub.f32 %v161, %v292
      %v325 = vsub.f32 %v162, %v293
      %v326 = vsub.f32 %v163, %v294
      %v327 = vsub.f32 %v164, %v295
      %v328 = vsub.f32 %v165, %v296
      %v329 = vsub.f32 %v166, %v297
      %v330 = vsub.f32 %v167, %v298
      %v331 = vsub.f32 %v168, %v299
      %v332 = vsub.f32 %v169, %v300
      %v333 = vsub.f32 %v170, %v301
      %v334 = vsub.f32 %v171, %v302
      %v335 = vsub.f32 %v172, %v303
      %v336 = vsub.f32 %v173, %v304
      %v337 = vsub.f32 %v174, %v305
      %v338 = vsub.f32 %v175, %v306
      %v339 = vsub.f32 %v176, %v307
      %v340 = vsub.f32 %v177, %v308
      %v341 = vsub.f32 %v178, %v309
      %v342 = vmul.f32 %v310, %v310
      %v343 = vmul.f32 %v311, %v311
      %v344 = vmul.f32 %v312, %v312
      %v345 = vmul.f32 %v313, %v313
      %v346 = vmul.f32 %v314, %v314
      %v347 = vmul.f32 %v315, %v315
      %v348 = vmul.f32 %v316, %v316
      %v349 = vmul.f32 %v317, %v317
      %v350 = vmul.f32 %v318, %v318
      %v351 = vmul.f32 %v319, %v319
      %v352 = vmul.f32 %v320, %v320
      %v353 = vmul.f32 %v321, %v321
      %v354 = vmul.f32 %v322, %v322
      %v355 = vmul.f32 %v323, %v323
      %v356 = vmul.f32 %v324, %v324
      %v357 = vmul.f32 %v325, %v325
      %v358 = vmul.f32 %v326, %v326
      %v359 = vmul.f32 %v327, %v327
      %v360 = vmul.f32 %v328, %v328
      %v361 = vmul.f32 %v329, %v329
      %v362 = vmul.f32 %v330, %v330
      %v363 = vmul.f32 %v331, %v331
      %v364 = vmul.f32 %v332, %v332
      %v365 = vmul.f32 %v333, %v333
      %v366 = vmul.f32 %v334, %v334
      %v367 = vmul.f32 %v335, %v335
      %v368 = vmul.f32 %v336, %v336
      %v369 = vmul.f32 %v337, %v337
      %v370 = vmul.f32 %v338, %v338
      %v371 = vmul.f32 %v339, %v339
      %v372 = vmul.f32 %v340, %v340
      %v373 = vmul.f32 %v341, %v341
      %v374 = vsel %vm180, %v342, 0.0
      %375 = vadd.xlane.f32.xlu0 %v374
      %v376 = vpop.xlane.xlu0 %375
      %v377 = vsel %vm180, %v343, 0.0
      %378 = vadd.xlane.f32.xlu0 %v377
      %v379 = vpop.xlane.xlu0 %378
      %v380 = vsel %vm180, %v344, 0.0
      %381 = vadd.xlane.f32.xlu0 %v380
      %v382 = vpop.xlane.xlu0 %381
      %v383 = vsel %vm180, %v345, 0.0
      %384 = vadd.xlane.f32.xlu0 %v383
      %v385 = vpop.xlane.xlu0 %384
      %v386 = vsel %vm180, %v346, 0.0
      %387 = vadd.xlane.f32.xlu0 %v386
      %v388 = vpop.xlane.xlu0 %387
      %v389 = vsel %vm180, %v347, 0.0
      %390 = vadd.xlane.f32.xlu0 %v389
      %v391 = vpop.xlane.xlu0 %390
      %v392 = vsel %vm180, %v348, 0.0
      %393 = vadd.xlane.f32.xlu0 %v392
      %v394 = vpop.xlane.xlu0 %393
      %v395 = vsel %vm180, %v349, 0.0
      %396 = vadd.xlane.f32.xlu0 %v395
      %v397 = vpop.xlane.xlu0 %396
      %v398 = vsel %vm180, %v350, 0.0
      %399 = vadd.xlane.f32.xlu0 %v398
      %v400 = vpop.xlane.xlu0 %399
      %v401 = vsel %vm180, %v351, 0.0
      %402 = vadd.xlane.f32.xlu0 %v401
      %v403 = vpop.xlane.xlu0 %402
      %v404 = vsel %vm180, %v352, 0.0
      %405 = vadd.xlane.f32.xlu0 %v404
      %v406 = vpop.xlane.xlu0 %405
      %v407 = vsel %vm180, %v353, 0.0
      %408 = vadd.xlane.f32.xlu0 %v407
      %v409 = vpop.xlane.xlu0 %408
      %v410 = vsel %vm180, %v354, 0.0
      %411 = vadd.xlane.f32.xlu0 %v410
      %v412 = vpop.xlane.xlu0 %411
      %v413 = vsel %vm180, %v355, 0.0
      %414 = vadd.xlane.f32.xlu0 %v413
      %v415 = vpop.xlane.xlu0 %414
      %v416 = vsel %vm180, %v356, 0.0
      %417 = vadd.xlane.f32.xlu0 %v416
      %v418 = vpop.xlane.xlu0 %417
      %v419 = vsel %vm180, %v357, 0.0
      %420 = vadd.xlane.f32.xlu0 %v419
      %v421 = vpop.xlane.xlu0 %420
      %v422 = vsel %vm180, %v358, 0.0
      %423 = vadd.xlane.f32.xlu0 %v422
      %v424 = vpop.xlane.xlu0 %423
      %v425 = vsel %vm180, %v359, 0.0
      %426 = vadd.xlane.f32.xlu0 %v425
      %v427 = vpop.xlane.xlu0 %426
      %v428 = vsel %vm180, %v360, 0.0
      %429 = vadd.xlane.f32.xlu0 %v428
      %v430 = vpop.xlane.xlu0 %429
      %v431 = vsel %vm180, %v361, 0.0
      %432 = vadd.xlane.f32.xlu0 %v431
      %v433 = vpop.xlane.xlu0 %432
      %v434 = vsel %vm180, %v362, 0.0
      %435 = vadd.xlane.f32.xlu0 %v434
      %v436 = vpop.xlane.xlu0 %435
      %v437 = vsel %vm180, %v363, 0.0
      %438 = vadd.xlane.f32.xlu0 %v437
      %v439 = vpop.xlane.xlu0 %438
      %v440 = vsel %vm180, %v364, 0.0
      %441 = vadd.xlane.f32.xlu0 %v440
      %v442 = vpop.xlane.xlu0 %441
      %v443 = vsel %vm180, %v365, 0.0
      %444 = vadd.xlane.f32.xlu0 %v443
      %v445 = vpop.xlane.xlu0 %444
      %v446 = vsel %vm180, %v366, 0.0
      %447 = vadd.xlane.f32.xlu0 %v446
      %v448 = vpop.xlane.xlu0 %447
      %v449 = vsel %vm180, %v367, 0.0
      %450 = vadd.xlane.f32.xlu0 %v449
      %v451 = vpop.xlane.xlu0 %450
      %v452 = vsel %vm180, %v368, 0.0
      %453 = vadd.xlane.f32.xlu0 %v452
      %v454 = vpop.xlane.xlu0 %453
      %v455 = vsel %vm180, %v369, 0.0
      %456 = vadd.xlane.f32.xlu0 %v455
      %v457 = vpop.xlane.xlu0 %456
      %v458 = vsel %vm180, %v370, 0.0
      %459 = vadd.xlane.f32.xlu0 %v458
      %v460 = vpop.xlane.xlu0 %459
      %v461 = vsel %vm180, %v371, 0.0
      %462 = vadd.xlane.f32.xlu0 %v461
      %v463 = vpop.xlane.xlu0 %462
      %v464 = vsel %vm180, %v372, 0.0
      %465 = vadd.xlane.f32.xlu0 %v464
      %v466 = vpop.xlane.xlu0 %465
      %v467 = vsel %vm180, %v373, 0.0
      %468 = vadd.xlane.f32.xlu0 %v467
      %v469 = vpop.xlane.xlu0 %468
      %v470 = vmul.f32 %v376, %v277
      %v471 = vmul.f32 %v379, %v277
      %v472 = vmul.f32 %v382, %v277
      %v473 = vmul.f32 %v385, %v277
      %v474 = vmul.f32 %v388, %v277
      %v475 = vmul.f32 %v391, %v277
      %v476 = vmul.f32 %v394, %v277
      %v477 = vmul.f32 %v397, %v277
      %v478 = vmul.f32 %v400, %v277
      %v479 = vmul.f32 %v403, %v277
      %v480 = vmul.f32 %v406, %v277
      %v481 = vmul.f32 %v409, %v277
      %v482 = vmul.f32 %v412, %v277
      %v483 = vmul.f32 %v415, %v277
      %v484 = vmul.f32 %v418, %v277
      %v485 = vmul.f32 %v421, %v277
      %v486 = vmul.f32 %v424, %v277
      %v487 = vmul.f32 %v427, %v277
      %v488 = vmul.f32 %v430, %v277
      %v489 = vmul.f32 %v433, %v277
      %v490 = vmul.f32 %v436, %v277
      %v491 = vmul.f32 %v439, %v277
      %v492 = vmul.f32 %v442, %v277
      %v493 = vmul.f32 %v445, %v277
      %v494 = vmul.f32 %v448, %v277
      %v495 = vmul.f32 %v451, %v277
      %v496 = vmul.f32 %v454, %v277
      %v497 = vmul.f32 %v457, %v277
      %v498 = vmul.f32 %v460, %v277
      %v499 = vmul.f32 %v463, %v277
      %v500 = vmul.f32 %v466, %v277
      %v501 = vmul.f32 %v469, %v277
      %v502 = vadd.f32 %v470, 1e-05
      %v503 = vadd.f32 %v471, 1e-05
      %v504 = vadd.f32 %v472, 1e-05
      %v505 = vadd.f32 %v473, 1e-05
      %v506 = vadd.f32 %v474, 1e-05
      %v507 = vadd.f32 %v475, 1e-05
      %v508 = vadd.f32 %v476, 1e-05
      %v509 = vadd.f32 %v477, 1e-05
      %v510 = vadd.f32 %v478, 1e-05
      %v511 = vadd.f32 %v479, 1e-05
      %v512 = vadd.f32 %v480, 1e-05
      %v513 = vadd.f32 %v481, 1e-05
      %v514 = vadd.f32 %v482, 1e-05
      %v515 = vadd.f32 %v483, 1e-05
      %v516 = vadd.f32 %v484, 1e-05
      %v517 = vadd.f32 %v485, 1e-05
      %v518 = vadd.f32 %v486, 1e-05
      %v519 = vadd.f32 %v487, 1e-05
      %v520 = vadd.f32 %v488, 1e-05
      %v521 = vadd.f32 %v489, 1e-05
      %v522 = vadd.f32 %v490, 1e-05
      %v523 = vadd.f32 %v491, 1e-05
      %v524 = vadd.f32 %v492, 1e-05
      %v525 = vadd.f32 %v493, 1e-05
      %v526 = vadd.f32 %v494, 1e-05
      %v527 = vadd.f32 %v495, 1e-05
      %v528 = vadd.f32 %v496, 1e-05
      %v529 = vadd.f32 %v497, 1e-05
      %v530 = vadd.f32 %v498, 1e-05
      %v531 = vadd.f32 %v499, 1e-05
      %v532 = vadd.f32 %v500, 1e-05
      %v533 = vadd.f32 %v501, 1e-05
      %v534 = vrsqrt.pop %v502
      %v535 = vrsqrt.pop %v503
      %v536 = vrsqrt.pop %v504
      %v537 = vrsqrt.pop %v505
      %v538 = vrsqrt.pop %v506
      %v539 = vrsqrt.pop %v507
      %v540 = vrsqrt.pop %v508
      %v541 = vrsqrt.pop %v509
      %v542 = vrsqrt.pop %v510
      %v543 = vrsqrt.pop %v511
      %v544 = vrsqrt.pop %v512
      %v545 = vrsqrt.pop %v513
      %v546 = vrsqrt.pop %v514
      %v547 = vrsqrt.pop %v515
      %v548 = vrsqrt.pop %v516
      %v549 = vrsqrt.pop %v517
      %v550 = vrsqrt.pop %v518
      %v551 = vrsqrt.pop %v519
      %v552 = vrsqrt.pop %v520
      %v553 = vrsqrt.pop %v521
      %v554 = vrsqrt.pop %v522
      %v555 = vrsqrt.pop %v523
      %v556 = vrsqrt.pop %v524
      %v557 = vrsqrt.pop %v525
      %v558 = vrsqrt.pop %v526
      %v559 = vrsqrt.pop %v527
      %v560 = vrsqrt.pop %v528
      %v561 = vrsqrt.pop %v529
      %v562 = vrsqrt.pop %v530
      %v563 = vrsqrt.pop %v531
      %v564 = vrsqrt.pop %v532
      %v565 = vrsqrt.pop %v533
      %v566 = vmul.f32 %v147, %v534
      %v567 = vmul.f32 %v148, %v535
      %v568 = vmul.f32 %v149, %v536
      %v569 = vmul.f32 %v150, %v537
      %v570 = vmul.f32 %v151, %v538
      %v571 = vmul.f32 %v152, %v539
      %v572 = vmul.f32 %v153, %v540
      %v573 = vmul.f32 %v154, %v541
      %v574 = vmul.f32 %v155, %v542
      %v575 = vmul.f32 %v156, %v543
      %v576 = vmul.f32 %v157, %v544
      %v577 = vmul.f32 %v158, %v545
      %v578 = vmul.f32 %v159, %v546
      %v579 = vmul.f32 %v160, %v547
      %v580 = vmul.f32 %v161, %v548
      %v581 = vmul.f32 %v162, %v549
      %v582 = vmul.f32 %v163, %v550
      %v583 = vmul.f32 %v164, %v551
      %v584 = vmul.f32 %v165, %v552
      %v585 = vmul.f32 %v166, %v553
      %v586 = vmul.f32 %v167, %v554
      %v587 = vmul.f32 %v168, %v555
      %v588 = vmul.f32 %v169, %v556
      %v589 = vmul.f32 %v170, %v557
      %v590 = vmul.f32 %v171, %v558
      %v591 = vmul.f32 %v172, %v559
      %v592 = vmul.f32 %v173, %v560
      %v593 = vmul.f32 %v174, %v561
      %v594 = vmul.f32 %v175, %v562
      %v595 = vmul.f32 %v176, %v563
      %v596 = vmul.f32 %v177, %v564
      %v597 = vmul.f32 %v178, %v565
      %v599 = vlaneseq
      %v600 = vshrl.u32 %v599, 7
      %v601 = vsub.s32 0, %v600
      %v602 = vrot.slane %v179, %v601
      %v604 = vmul.f32 %v566, %v602
      %v605 = vmul.f32 %v567, %v602
      %v606 = vmul.f32 %v568, %v602
      %v607 = vmul.f32 %v569, %v602
      %v608 = vmul.f32 %v570, %v602
      %v609 = vmul.f32 %v571, %v602
      %v610 = vmul.f32 %v572, %v602
      %v611 = vmul.f32 %v573, %v602
      %v612 = vmul.f32 %v574, %v602
      %v613 = vmul.f32 %v575, %v602
      %v614 = vmul.f32 %v576, %v602
      %v615 = vmul.f32 %v577, %v602
      %v616 = vmul.f32 %v578, %v602
      %v617 = vmul.f32 %v579, %v602
      %v618 = vmul.f32 %v580, %v602
      %v619 = vmul.f32 %v581, %v602
      %v620 = vmul.f32 %v582, %v602
      %v621 = vmul.f32 %v583, %v602
      %v622 = vmul.f32 %v584, %v602
      %v623 = vmul.f32 %v585, %v602
      %v624 = vmul.f32 %v586, %v602
      %v625 = vmul.f32 %v587, %v602
      %v626 = vmul.f32 %v588, %v602
      %v627 = vmul.f32 %v589, %v602
      %v628 = vmul.f32 %v590, %v602
      %v629 = vmul.f32 %v591, %v602
      %v630 = vmul.f32 %v592, %v602
      %v631 = vmul.f32 %v593, %v602
      %v632 = vmul.f32 %v594, %v602
      %v633 = vmul.f32 %v595, %v602
      %v634 = vmul.f32 %v596, %v602
      %v635 = vmul.f32 %v597, %v602
      %636 = vst.msk [vmem:[%s145] sm:$0xff] %vm180, %v604
      %637 = vst.msk [vmem:[%s145 + $0x8] sm:$0xff] %vm180, %v605
      %638 = vst.msk [vmem:[%s145 + $0x10] sm:$0xff] %vm180, %v606
      %639 = vst.msk [vmem:[%s145 + $0x18] sm:$0xff] %vm180, %v607
      %640 = vst.msk [vmem:[%s145 + $0x20] sm:$0xff] %vm180, %v608
      %641 = vst.msk [vmem:[%s145 + $0x28] sm:$0xff] %vm180, %v609
      %642 = vst.msk [vmem:[%s145 + $0x30] sm:$0xff] %vm180, %v610
      %643 = vst.msk [vmem:[%s145 + $0x38] sm:$0xff] %vm180, %v611
      %644 = vst.msk [vmem:[%s145 + $0x40] sm:$0xff] %vm180, %v612
      %645 = vst.msk [vmem:[%s145 + $0x48] sm:$0xff] %vm180, %v613
      %646 = vst.msk [vmem:[%s145 + $0x50] sm:$0xff] %vm180, %v614
      %647 = vst.msk [vmem:[%s145 + $0x58] sm:$0xff] %vm180, %v615
      %648 = vst.msk [vmem:[%s145 + $0x60] sm:$0xff] %vm180, %v616
      %649 = vst.msk [vmem:[%s145 + $0x68] sm:$0xff] %vm180, %v617
      %650 = vst.msk [vmem:[%s145 + $0x70] sm:$0xff] %vm180, %v618
      %651 = vst.msk [vmem:[%s145 + $0x78] sm:$0xff] %vm180, %v619
      %652 = vst.msk [vmem:[%s145 + $0x80] sm:$0xff] %vm180, %v620
      %653 = vst.msk [vmem:[%s145 + $0x88] sm:$0xff] %vm180, %v621
      %654 = vst.msk [vmem:[%s145 + $0x90] sm:$0xff] %vm180, %v622
      %655 = vst.msk [vmem:[%s145 + $0x98] sm:$0xff] %vm180, %v623
      %656 = vst.msk [vmem:[%s145 + $0xa0] sm:$0xff] %vm180, %v624
      %657 = vst.msk [vmem:[%s145 + $0xa8] sm:$0xff] %vm180, %v625
      %658 = vst.msk [vmem:[%s145 + $0xb0] sm:$0xff] %vm180, %v626
      %659 = vst.msk [vmem:[%s145 + $0xb8] sm:$0xff] %vm180, %v627
      %660 = vst.msk [vmem:[%s145 + $0xc0] sm:$0xff] %vm180, %v628
      %661 = vst.msk [vmem:[%s145 + $0xc8] sm:$0xff] %vm180, %v629
      %662 = vst.msk [vmem:[%s145 + $0xd0] sm:$0xff] %vm180, %v630
      %663 = vst.msk [vmem:[%s145 + $0xd8] sm:$0xff] %vm180, %v631
      %664 = vst.msk [vmem:[%s145 + $0xe0] sm:$0xff] %vm180, %v632
      %665 = vst.msk [vmem:[%s145 + $0xe8] sm:$0xff] %vm180, %v633
      %666 = vst.msk [vmem:[%s145 + $0xf0] sm:$0xff] %vm180, %v634
      %667 = vst.msk [vmem:[%s145 + $0xf8] sm:$0xff] %vm180, %v635
      %s668 = smul.u32 32, %s13
      %p669 = scmp.lt.s32.totalorder %s668, 63
      %s670 = scalar_select %p669, %s668, 63
      %s671 = smul.addr %s670, 8
      %s672 = scalar_lea.vmem %s2, %s671
      // Predicated region
      $region29: #{tpu_custom_call.1} parent=27 // pred_check
        %p673 = pneg %p78
      $region30: #{tpu_custom_call.1} parent=27 // pred_check_branch
        %675 = sbr.rel (%p673) target = $region32
      $region31: #{tpu_custom_call.1} parent=27 // pred_region
        %s676 = smul.u32 32, %s13
      $region32: #{tpu_custom_call.1} parent=27 // pred_fallthru
        _
    $region28: #{tpu_custom_call.1} parent=5 // pred_fallthru
      _
    %p677 = scmp.le.s32.totalorder 2, %s8
    // Predicated region
    $region33: #{tpu_custom_call.1} parent=5 // pred_check
      %p678 = pneg %p677
    $region34: #{tpu_custom_call.1} parent=5 // pred_check_branch
      %680 = sbr.rel (%p678) target = $region36
    $region35: #{tpu_custom_call.1} parent=5 // pred_region
      %s681 = ssub.s32 %s8, 2
      // Predicated region
      $region37: #{tpu_custom_call.1} parent=35 // pred_check
        %p682 = pneg %p84
      $region38: #{tpu_custom_call.1} parent=35 // pred_check_branch
        %684 = sbr.rel (%p682) target = $region40
      $region39: #{tpu_custom_call.1} parent=35 // pred_region
        %s685 = smul.u32 32, %s14
        %p686 = scmp.lt.s32.totalorder %s685, 63
        %s687 = scalar_select %p686, %s685, 63
        %s688 = smul.addr %s687, 8
        %s689 = scalar_lea.vmem %s2, %s688
      $region40: #{tpu_custom_call.1} parent=35 // pred_fallthru
        _
    $region36: #{tpu_custom_call.1} parent=5 // pred_fallthru
      _
  $region6: #{tpu_custom_call.1} parent=0 // loop_footer
    %s12 = sadd.s32 1, %s8
  $region7: #{tpu_custom_call.1} parent=0 // loop_footer_branch
    %7 = sbr.rel target = $region3
  $region8: #{tpu_custom_call.1} parent=0 // loop_exit
    _

</llo_original>
